<compile_context>
chip_gen: v7x
topology: tpu7x:2x2x1
jax: 0.10.0
libtpu: 0.0.40
codegen_flags: <defaults>
</compile_context>

<pallas_src>
import math

import jax
import jax.numpy as jnp
from jax.experimental import pallas as pl
from jax.experimental.pallas import tpu as pltpu


def _sage_gcn_kernel(src_ref, nbr_ref, w_self_ref, w_agg_ref, out_ref):
    # Self projection: (TN, D) @ (D, H), f32 MXU accumulation.
    hidden = jnp.dot(
        src_ref[...], w_self_ref[...], preferred_element_type=jnp.float32
    )
    # Neighbor mean-aggregation + projection folded into one lane-dense MXU
    # matmul: (TN, K*D) @ (K*D, H), where the weight is tile(W_agg / K, (K, 1)).
    hidden = hidden + jnp.dot(
        nbr_ref[...], w_agg_ref[...], preferred_element_type=jnp.float32
    )
    # activation == relu
    out_ref[...] = jnp.maximum(hidden, 0.0).astype(out_ref.dtype)


def sage_gcn_forward(src_feats, nbr_feats, w_self, w_agg,
                     *, block_n=1024, out_dtype=None):
    """Forward pass of SageGCN (mean-aggregation, sum-combine, relu).

    Streams src/nbr in their stored dtype (no wrapper cast pass).  Output dtype
    defaults to the feature dtype.
    """
    n, d = src_feats.shape
    _, k, d2 = nbr_feats.shape
    assert d2 == d
    h = w_self.shape[1]

    in_dtype = src_feats.dtype
    out_dtype = in_dtype if out_dtype is None else out_dtype
    bytes_in = jnp.dtype(in_dtype).itemsize
    bytes_out = jnp.dtype(out_dtype).itemsize

    # Trace-time weight prep (tiny): fold the 1/K of 'mean' into the aggregator
    # weight and tile it along the contraction dim so the mean rides on the MXU.
    w_self_c = w_self.astype(in_dtype)                                 # (D, H)
    w_agg_tiled = jnp.tile(
        w_agg.astype(jnp.float32) / float(k), (k, 1)
    ).astype(in_dtype)                                                 # (K*D, H)

    # Free row-major view: (N, K, D) -> (N, K*D); makes the neighbor DMA and
    # loads lane-dense (K*D is a multiple of 128 for typical K, D).
    nbr_flat = nbr_feats.reshape(n, k * d)

    # Node tile: multiple of the sublane granularity; large to amortize the
    # ~600-cycle per-grid-step overhead; capped so the double-buffered working
    # set fits a v7x-safe VMEM budget (64 MiB physical -> ~48 MiB usable).
    sub = {1: 32, 2: 16}.get(bytes_in, 8)
    vmem_budget = 48 * 1024 * 1024
    weight_bytes = (d + k * d) * h * bytes_in
    per_row = 2 * ((d + k * d) * bytes_in) + 2 * (h * bytes_out)   # dbl-buffered
    tn_cap = max(sub, (vmem_budget - 2 * weight_bytes) // per_row)
    tn = min(block_n, tn_cap, pl.cdiv(n, sub) * sub)
    tn = max(sub, (tn // sub) * sub)

    grid = (pl.cdiv(n, tn),)

    vmem_limit = int(min(max(tn * per_row + 2 * weight_bytes + (4 << 20),
                             8 << 20),
                         48 << 20))

    cost = pl.CostEstimate(
        flops=2 * n * (k + 1) * d * h,
        transcendentals=0,
        bytes_accessed=(n * (k + 1) * d * bytes_in
                        + n * h * bytes_out
                        + (k + 1) * d * h * bytes_in),
    )

    return pl.pallas_call(
        _sage_gcn_kernel,
        out_shape=jax.ShapeDtypeStruct((n, h), out_dtype),
        grid=grid,
        in_specs=[
            pl.BlockSpec((tn, d), lambda i: (i, 0)),          # src tile, streamed
            pl.BlockSpec((tn, k * d), lambda i: (i, 0)),      # flat neighbor tile
            pl.BlockSpec((d, h), lambda i: (0, 0)),           # W_self, VMEM-resident
            pl.BlockSpec((k * d, h), lambda i: (0, 0)),       # tiled W_agg/K, resident
        ],
        out_specs=pl.BlockSpec((tn, h), lambda i: (i, 0)),
        compiler_params=pltpu.CompilerParams(
            dimension_semantics=("parallel",),   # shards across v7x's 2 TCs
            vmem_limit_bytes=vmem_limit,
        ),
        cost_estimate=cost,
    )(src_feats, nbr_flat, w_self_c, w_agg_tiled)


def _kaiming_uniform(key, fan_in, fan_out):
    # torch.nn.init.kaiming_uniform_ default: a=0, fan_in mode, leaky_relu gain
    gain = math.sqrt(2.0)
    bound = gain * math.sqrt(3.0 / fan_in)
    return jax.random.uniform(
        key, (fan_in, fan_out), dtype=jnp.float32, minval=-bound, maxval=bound
    )


def _reference(src, nbr, w_self, w_agg):
    # Pure-JAX reference of the module forward (mean / sum / relu), f32 math.
    s = src.astype(jnp.float32)
    m = jnp.mean(nbr.astype(jnp.float32), axis=1)
    return jnp.maximum(s @ w_self + m @ w_agg, 0.0)


if __name__ == "__main__":
    # Small shapes consistent with the module (node-major, feature-last).
    N = 256           # number of source nodes
    K = 8             # sampled neighbors per node
    INPUT_DIM = 32
    HIDDEN_DIM = 32

    key = jax.random.PRNGKey(0)
    k_src, k_nbr, k_wself, k_wagg = jax.random.split(key, 4)

    src_node_features = jax.random.normal(k_src, (N, INPUT_DIM), dtype=jnp.float32)
    neighbor_node_features = jax.random.normal(
        k_nbr, (N, K, INPUT_DIM), dtype=jnp.float32
    )

    # Parameter shapes per module __init__:
    #   SageGCN.weight            : (input_dim, hidden_dim)
    #   NeighborAggregator.weight : (input_dim, hidden_dim)
    w_self = _kaiming_uniform(k_wself, INPUT_DIM, HIDDEN_DIM)
    w_agg = _kaiming_uniform(k_wagg, INPUT_DIM, HIDDEN_DIM)

    # --- f32 path: tight semantics check --------------------------------
    ref = _reference(src_node_features, neighbor_node_features, w_self, w_agg)
    out_f32 = jax.block_until_ready(
        sage_gcn_forward(src_node_features, neighbor_node_features, w_self, w_agg)
    )
    assert out_f32.shape == (N, HIDDEN_DIM)
    assert out_f32.dtype == jnp.float32
    assert jnp.allclose(out_f32, ref, atol=1e-4, rtol=1e-4)

    # --- bf16 path: features stored in bf16 upstream (no wrapper cast) ---
    src_bf = src_node_features.astype(jnp.bfloat16)
    nbr_bf = neighbor_node_features.astype(jnp.bfloat16)
    ref_bf = _reference(src_bf, nbr_bf, w_self, w_agg)
    out_bf16 = jax.block_until_ready(
        sage_gcn_forward(src_bf, nbr_bf, w_self, w_agg)
    )
    assert out_bf16.shape == (N, HIDDEN_DIM)
    assert out_bf16.dtype == jnp.bfloat16
    assert jnp.allclose(out_bf16.astype(jnp.float32), ref_bf, atol=5e-2, rtol=5e-2)

    # --- ragged N (not a multiple of the tile): masked OOB writeback -----
    N2 = 200
    src2 = src_node_features[:N2]
    nbr2 = neighbor_node_features[:N2]
    ref2 = _reference(src2, nbr2, w_self, w_agg)
    out2 = jax.block_until_ready(
        sage_gcn_forward(src2, nbr2, w_self, w_agg, block_n=128)
    )
    assert out2.shape == (N2, HIDDEN_DIM)
    assert jnp.allclose(out2, ref2, atol=1e-4, rtol=1e-4)

    print("KERNEL_OK")
</pallas_src>

<mosaic_0001>
module attributes {stable_mosaic.version = 11 : i64} {
  func.func @_sage_gcn_kernel(%arg0: i32, %arg1: memref<256x32xf32, #tpu.memory_space<vmem>>, %arg2: memref<256x256xf32, #tpu.memory_space<vmem>>, %arg3: memref<32x32xf32, #tpu.memory_space<vmem>>, %arg4: memref<256x32xf32, #tpu.memory_space<vmem>>, %arg5: memref<256x32xf32, #tpu.memory_space<vmem>>) attributes {dimension_semantics = [#tpu.dimension_semantics<parallel>], iteration_bounds = array<i64: 1>, scalar_prefetch = 0 : i64, scratch_operands = 0 : i64, tpu.core_type = #tpu.core_type<tc>, window_params = [{transform_indices = @transform_0, window_bounds = array<i64: 256, 32>}, {transform_indices = @transform_1, window_bounds = array<i64: 256, 256>}, {pipeline_mode = #tpu.pipeline_mode<synchronous>, transform_indices = @transform_2, window_bounds = array<i64: 32, 32>}, {pipeline_mode = #tpu.pipeline_mode<synchronous>, transform_indices = @transform_3, window_bounds = array<i64: 256, 32>}, {transform_indices = @transform_4, window_bounds = array<i64: 256, 32>}]} {
    %c0 = arith.constant 0 : index
    %c0_0 = arith.constant 0 : index
    %0 = vector.load %arg1[%c0, %c0_0] : memref<256x32xf32, #tpu.memory_space<vmem>>, vector<256x32xf32>
    %c0_1 = arith.constant 0 : index
    %c0_2 = arith.constant 0 : index
    %1 = vector.load %arg3[%c0_1, %c0_2] : memref<32x32xf32, #tpu.memory_space<vmem>>, vector<32x32xf32>
    %cst = arith.constant dense<0.000000e+00> : vector<256x32xf32>
    %2 = tpu.matmul %0, %1, %cst {dimension_numbers = #tpu.dot_dimension_numbers<[1], [0], [0], [1], [0, 0, 1, 1], [], []>} : vector<256x32xf32>, vector<32x32xf32>, vector<256x32xf32> -> vector<256x32xf32>
    %c0_3 = arith.constant 0 : index
    %c0_4 = arith.constant 0 : index
    %3 = vector.load %arg2[%c0_3, %c0_4] : memref<256x256xf32, #tpu.memory_space<vmem>>, vector<256x256xf32>
    %c0_5 = arith.constant 0 : index
    %c0_6 = arith.constant 0 : index
    %4 = vector.load %arg4[%c0_5, %c0_6] : memref<256x32xf32, #tpu.memory_space<vmem>>, vector<256x32xf32>
    %cst_7 = arith.constant dense<0.000000e+00> : vector<256x32xf32>
    %5 = tpu.matmul %3, %4, %cst_7 {dimension_numbers = #tpu.dot_dimension_numbers<[1], [0], [0], [1], [0, 0, 1, 1], [], []>} : vector<256x256xf32>, vector<256x32xf32>, vector<256x32xf32> -> vector<256x32xf32>
    %6 = arith.addf %2, %5 : vector<256x32xf32>
    %cst_8 = arith.constant 0.000000e+00 : f32
    %7 = vector.broadcast %cst_8 : f32 to vector<256x32xf32>
    %8 = arith.maximumf %6, %7 : vector<256x32xf32>
    %c0_9 = arith.constant 0 : index
    %c0_10 = arith.constant 0 : index
    %9 = vector.load %arg5[%c0_9, %c0_10] : memref<256x32xf32, #tpu.memory_space<vmem>>, vector<256x32xf32>
    tpu.vector_store %arg5[%c0_9, %c0_10], %8 {strides = array<i32>} : memref<256x32xf32, #tpu.memory_space<vmem>>, vector<256x32xf32>,
    return
  }
  func.func @transform_0(%arg0: i32) -> (i32, i32) {
    %c0_i32 = arith.constant 0 : i32
    %c0_i32_0 = arith.constant 0 : i32
    return %arg0, %c0_i32 : i32, i32
  }
  func.func @transform_1(%arg0: i32) -> (i32, i32) {
    %c0_i32 = arith.constant 0 : i32
    %c0_i32_0 = arith.constant 0 : i32
    return %arg0, %c0_i32 : i32, i32
  }
  func.func @transform_2(%arg0: i32) -> (i32, i32) {
    %c0_i32 = arith.constant 0 : i32
    %c0_i32_0 = arith.constant 0 : i32
    %c0_i32_1 = arith.constant 0 : i32
    return %c0_i32, %c0_i32_0 : i32, i32
  }
  func.func @transform_3(%arg0: i32) -> (i32, i32) {
    %c0_i32 = arith.constant 0 : i32
    %c0_i32_0 = arith.constant 0 : i32
    %c0_i32_1 = arith.constant 0 : i32
    return %c0_i32, %c0_i32_0 : i32, i32
  }
  func.func @transform_4(%arg0: i32) -> (i32, i32) {
    %c0_i32 = arith.constant 0 : i32
    %c0_i32_0 = arith.constant 0 : i32
    return %arg0, %c0_i32 : i32, i32
  }
}

</mosaic_0001>

<llo_original>
// kernel: tpu_custom_call.1
$region0: #{tpu_custom_call.1}
  #allocation0 [shape = 'u32[]', space=smem, size = 0x4, offset = 0x4, fixed_abs, tag = 'smem constant byte address 0x4 - core index']
  #allocation1 [shape = 'u32[144,128]{1,0:T(1,128)}', space=vmem, size = 0x12000, scoped, tag = 'internal scratch']
  %s0 = inlined_call_operand.vmem [shape: f32[256,32], index: 0, kind: input, shape index: {}]
  %s1 = inlined_call_operand.vmem [shape: f32[256,256], index: 1, kind: input, shape index: {}]
  %s2 = inlined_call_operand.vmem [shape: f32[32,32], index: 2, kind: input, shape index: {}]
  %s3 = inlined_call_operand.vmem [shape: f32[256,32], index: 3, kind: input, shape index: {}]
  %s4 = inlined_call_operand.vmem [shape: f32[256,32], index: 4, kind: output, shape index: {}]
  %s5 = sld [smem:[#allocation0]]
  $region26: #{tpu_custom_call.1} parent=0
    _
  %s7 = ssub.s32 1, %s5
  %s8 = scalar_select 0, %s7, %s5
  // Predicated region
  $region2: #{tpu_custom_call.1} parent=0 // pred_check
    _
  $region3: #{tpu_custom_call.1} parent=0 // pred_check_branch
    %10 = sbr.rel (0) target = $region5
  $region4: #{tpu_custom_call.1} parent=0 // pred_region
    _
  $region5: #{tpu_custom_call.1} parent=0 // pred_fallthru
    _
  // Predicated region
  $region6: #{tpu_custom_call.1} parent=0 // pred_check
    _
  $region7: #{tpu_custom_call.1} parent=0 // pred_check_branch
    %12 = sbr.rel (0) target = $region9
  $region8: #{tpu_custom_call.1} parent=0 // pred_region
    _
  $region9: #{tpu_custom_call.1} parent=0 // pred_fallthru
    _
  // Predicated region
  $region10: #{tpu_custom_call.1} parent=0 // pred_check
    _
  $region11: #{tpu_custom_call.1} parent=0 // pred_check_branch
    %14 = sbr.rel (0) target = $region13
  $region12: #{tpu_custom_call.1} parent=0 // pred_region
    _
  $region13: #{tpu_custom_call.1} parent=0 // pred_fallthru
    _
  // Predicated region
  $region14: #{tpu_custom_call.1} parent=0 // pred_check
    _
  $region15: #{tpu_custom_call.1} parent=0 // pred_check_branch
    %16 = sbr.rel (0) target = $region17
  $region16: #{tpu_custom_call.1} parent=0 // pred_region
    _
  $region17: #{tpu_custom_call.1} parent=0 // pred_fallthru
    _
  %v17 = vld [vmem:[%s0] sm:$0xff]
  %v18 = vld [vmem:[%s0 + $0x8] sm:$0xff]
  %v19 = vld [vmem:[%s0 + $0x10] sm:$0xff]
  %v20 = vld [vmem:[%s0 + $0x18] sm:$0xff]
  %v21 = vld [vmem:[%s0 + $0x20] sm:$0xff]
  %v22 = vld [vmem:[%s0 + $0x28] sm:$0xff]
  %v23 = vld [vmem:[%s0 + $0x30] sm:$0xff]
  %v24 = vld [vmem:[%s0 + $0x38] sm:$0xff]
  %v25 = vld [vmem:[%s0 + $0x40] sm:$0xff]
  %v26 = vld [vmem:[%s0 + $0x48] sm:$0xff]
  %v27 = vld [vmem:[%s0 + $0x50] sm:$0xff]
  %v28 = vld [vmem:[%s0 + $0x58] sm:$0xff]
  %v29 = vld [vmem:[%s0 + $0x60] sm:$0xff]
  %v30 = vld [vmem:[%s0 + $0x68] sm:$0xff]
  %v31 = vld [vmem:[%s0 + $0x70] sm:$0xff]
  %v32 = vld [vmem:[%s0 + $0x78] sm:$0xff]
  %v33 = vld [vmem:[%s0 + $0x80] sm:$0xff]
  %v34 = vld [vmem:[%s0 + $0x88] sm:$0xff]
  %v35 = vld [vmem:[%s0 + $0x90] sm:$0xff]
  %v36 = vld [vmem:[%s0 + $0x98] sm:$0xff]
  %v37 = vld [vmem:[%s0 + $0xa0] sm:$0xff]
  %v38 = vld [vmem:[%s0 + $0xa8] sm:$0xff]
  %v39 = vld [vmem:[%s0 + $0xb0] sm:$0xff]
  %v40 = vld [vmem:[%s0 + $0xb8] sm:$0xff]
  %v41 = vld [vmem:[%s0 + $0xc0] sm:$0xff]
  %v42 = vld [vmem:[%s0 + $0xc8] sm:$0xff]
  %v43 = vld [vmem:[%s0 + $0xd0] sm:$0xff]
  %v44 = vld [vmem:[%s0 + $0xd8] sm:$0xff]
  %v45 = vld [vmem:[%s0 + $0xe0] sm:$0xff]
  %v46 = vld [vmem:[%s0 + $0xe8] sm:$0xff]
  %v47 = vld [vmem:[%s0 + $0xf0] sm:$0xff]
  %v48 = vld [vmem:[%s0 + $0xf8] sm:$0xff]
  %v49 = vld [vmem:[%s2] sm:$0xff]
  %v50 = vld [vmem:[%s2 + $0x8] sm:$0xff]
  %v51 = vld [vmem:[%s2 + $0x10] sm:$0xff]
  %v52 = vld [vmem:[%s2 + $0x18] sm:$0xff]
  %v53 = vld [vmem:[%s1] sm:$0xff]
  %v54 = vld [vmem:[%s1 + $0x8] sm:$0xff]
  %v55 = vld [vmem:[%s1 + $0x10] sm:$0xff]
  %v56 = vld [vmem:[%s1 + $0x18] sm:$0xff]
  %v57 = vld [vmem:[%s1 + $0x20] sm:$0xff]
  %v58 = vld [vmem:[%s1 + $0x28] sm:$0xff]
  %v59 = vld [vmem:[%s1 + $0x30] sm:$0xff]
  %v60 = vld [vmem:[%s1 + $0x38] sm:$0xff]
  %v61 = vld [vmem:[%s1 + $0x40] sm:$0xff]
  %v62 = vld [vmem:[%s1 + $0x48] sm:$0xff]
  %v63 = vld [vmem:[%s1 + $0x50] sm:$0xff]
  %v64 = vld [vmem:[%s1 + $0x58] sm:$0xff]
  %v65 = vld [vmem:[%s1 + $0x60] sm:$0xff]
  %v66 = vld [vmem:[%s1 + $0x68] sm:$0xff]
  %v67 = vld [vmem:[%s1 + $0x70] sm:$0xff]
  %v68 = vld [vmem:[%s1 + $0x78] sm:$0xff]
  %v69 = vld [vmem:[%s1 + $0x80] sm:$0xff]
  %v70 = vld [vmem:[%s1 + $0x88] sm:$0xff]
  %v71 = vld [vmem:[%s1 + $0x90] sm:$0xff]
  %v72 = vld [vmem:[%s1 + $0x98] sm:$0xff]
  %v73 = vld [vmem:[%s1 + $0xa0] sm:$0xff]
  %v74 = vld [vmem:[%s1 + $0xa8] sm:$0xff]
  %v75 = vld [vmem:[%s1 + $0xb0] sm:$0xff]
  %v76 = vld [vmem:[%s1 + $0xb8] sm:$0xff]
  %v77 = vld [vmem:[%s1 + $0xc0] sm:$0xff]
  %v78 = vld [vmem:[%s1 + $0xc8] sm:$0xff]
  %v79 = vld [vmem:[%s1 + $0xd0] sm:$0xff]
  %v80 = vld [vmem:[%s1 + $0xd8] sm:$0xff]
  %v81 = vld [vmem:[%s1 + $0xe0] sm:$0xff]
  %v82 = vld [vmem:[%s1 + $0xe8] sm:$0xff]
  %v83 = vld [vmem:[%s1 + $0xf0] sm:$0xff]
  %v84 = vld [vmem:[%s1 + $0xf8] sm:$0xff]
  %v85 = vld [vmem:[%s1 + $0x100] sm:$0xff]
  %v86 = vld [vmem:[%s1 + $0x108] sm:$0xff]
  %v87 = vld [vmem:[%s1 + $0x110] sm:$0xff]
  %v88 = vld [vmem:[%s1 + $0x118] sm:$0xff]
  %v89 = vld [vmem:[%s1 + $0x120] sm:$0xff]
  %v90 = vld [vmem:[%s1 + $0x128] sm:$0xff]
  %v91 = vld [vmem:[%s1 + $0x130] sm:$0xff]
  %v92 = vld [vmem:[%s1 + $0x138] sm:$0xff]
  %v93 = vld [vmem:[%s1 + $0x140] sm:$0xff]
  %v94 = vld [vmem:[%s1 + $0x148] sm:$0xff]
  %v95 = vld [vmem:[%s1 + $0x150] sm:$0xff]
  %v96 = vld [vmem:[%s1 + $0x158] sm:$0xff]
  %v97 = vld [vmem:[%s1 + $0x160] sm:$0xff]
  %v98 = vld [vmem:[%s1 + $0x168] sm:$0xff]
  %v99 = vld [vmem:[%s1 + $0x170] sm:$0xff]
  %v100 = vld [vmem:[%s1 + $0x178] sm:$0xff]
  %v101 = vld [vmem:[%s1 + $0x180] sm:$0xff]
  %v102 = vld [vmem:[%s1 + $0x188] sm:$0xff]
  %v103 = vld [vmem:[%s1 + $0x190] sm:$0xff]
  %v104 = vld [vmem:[%s1 + $0x198] sm:$0xff]
  %v105 = vld [vmem:[%s1 + $0x1a0] sm:$0xff]
  %v106 = vld [vmem:[%s1 + $0x1a8] sm:$0xff]
  %v107 = vld [vmem:[%s1 + $0x1b0] sm:$0xff]
  %v108 = vld [vmem:[%s1 + $0x1b8] sm:$0xff]
  %v109 = vld [vmem:[%s1 + $0x1c0] sm:$0xff]
  %v110 = vld [vmem:[%s1 + $0x1c8] sm:$0xff]
  %v111 = vld [vmem:[%s1 + $0x1d0] sm:$0xff]
  %v112 = vld [vmem:[%s1 + $0x1d8] sm:$0xff]
  %v113 = vld [vmem:[%s1 + $0x1e0] sm:$0xff]
  %v114 = vld [vmem:[%s1 + $0x1e8] sm:$0xff]
  %v115 = vld [vmem:[%s1 + $0x1f0] sm:$0xff]
  %v116 = vld [vmem:[%s1 + $0x1f8] sm:$0xff]
  %v117 = vld [vmem:[%s3] sm:$0xff]
  %v118 = vld [vmem:[%s3 + $0x8] sm:$0xff]
  %v119 = vld [vmem:[%s3 + $0x10] sm:$0xff]
  %v120 = vld [vmem:[%s3 + $0x18] sm:$0xff]
  %v121 = vld [vmem:[%s3 + $0x20] sm:$0xff]
  %v122 = vld [vmem:[%s3 + $0x28] sm:$0xff]
  %v123 = vld [vmem:[%s3 + $0x30] sm:$0xff]
  %v124 = vld [vmem:[%s3 + $0x38] sm:$0xff]
  %v125 = vld [vmem:[%s3 + $0x40] sm:$0xff]
  %v126 = vld [vmem:[%s3 + $0x48] sm:$0xff]
  %v127 = vld [vmem:[%s3 + $0x50] sm:$0xff]
  %v128 = vld [vmem:[%s3 + $0x58] sm:$0xff]
  %v129 = vld [vmem:[%s3 + $0x60] sm:$0xff]
  %v130 = vld [vmem:[%s3 + $0x68] sm:$0xff]
  %v131 = vld [vmem:[%s3 + $0x70] sm:$0xff]
  %v132 = vld [vmem:[%s3 + $0x78] sm:$0xff]
  %v133 = vld [vmem:[%s3 + $0x80] sm:$0xff]
  %v134 = vld [vmem:[%s3 + $0x88] sm:$0xff]
  %v135 = vld [vmem:[%s3 + $0x90] sm:$0xff]
  %v136 = vld [vmem:[%s3 + $0x98] sm:$0xff]
  %v137 = vld [vmem:[%s3 + $0xa0] sm:$0xff]
  %v138 = vld [vmem:[%s3 + $0xa8] sm:$0xff]
  %v139 = vld [vmem:[%s3 + $0xb0] sm:$0xff]
  %v140 = vld [vmem:[%s3 + $0xb8] sm:$0xff]
  %v141 = vld [vmem:[%s3 + $0xc0] sm:$0xff]
  %v142 = vld [vmem:[%s3 + $0xc8] sm:$0xff]
  %v143 = vld [vmem:[%s3 + $0xd0] sm:$0xff]
  %v144 = vld [vmem:[%s3 + $0xd8] sm:$0xff]
  %v145 = vld [vmem:[%s3 + $0xe0] sm:$0xff]
  %v146 = vld [vmem:[%s3 + $0xe8] sm:$0xff]
  %v147 = vld [vmem:[%s3 + $0xf0] sm:$0xff]
  %v148 = vld [vmem:[%s3 + $0xf8] sm:$0xff]
  %149 = vmatprep.subr.mxu0 0.0
  %150 = vmatpush1.msra.mxu0 %v117
  %151 = vmatprep.subr.mxu0 0.0
  %152 = vmatpush1.msra.mxu0 %v118
  %153 = vmatprep.subr.mxu0 0.0
  %154 = vmatpush1.msra.mxu0 %v119
  %155 = vmatprep.subr.mxu0 0.0
  %156 = vmatpush1.msra.mxu0 %v120
  %157 = vmatprep.subr.mxu0 0.0
  %158 = vmatpush1.msra.mxu0 %v121
  %159 = vmatprep.subr.mxu0 0.0
  %160 = vmatpush1.msra.mxu0 %v122
  %161 = vmatprep.subr.mxu0 0.0
  %162 = vmatpush1.msra.mxu0 %v123
  %163 = vmatprep.subr.mxu0 0.0
  %164 = vmatpush1.msra.mxu0 %v124
  %165 = vmatprep.subr.mxu0 0.0
  %166 = vmatpush1.msra.mxu0 %v125
  %167 = vmatprep.subr.mxu0 0.0
  %168 = vmatpush1.msra.mxu0 %v126
  %169 = vmatprep.subr.mxu0 0.0
  %170 = vmatpush1.msra.mxu0 %v127
  %171 = vmatprep.subr.mxu0 0.0
  %172 = vmatpush1.msra.mxu0 %v128
  %173 = vmatprep.subr.mxu0 0.0
  %174 = vmatpush1.msra.mxu0 %v129
  %175 = vmatprep.subr.mxu0 0.0
  %176 = vmatpush1.msra.mxu0 %v130
  %177 = vmatprep.subr.mxu0 0.0
  %178 = vmatpush1.msra.mxu0 %v131
  %179 = vmatprep.subr.mxu0 0.0
  %180 = vmatpush1.msra.mxu0 %v132
  %181 = vmatprep.subr.mxu0 0.0
  %182 = vmatpush1.msra.mxu0 %v133
  %183 = vmatprep.subr.mxu0 0.0
  %184 = vmatpush1.msra.mxu0 %v134
  %185 = vmatprep.subr.mxu0 0.0
  %186 = vmatpush1.msra.mxu0 %v135
  %187 = vmatprep.subr.mxu0 0.0
  %188 = vmatpush1.msra.mxu0 %v136
  %189 = vmatprep.subr.mxu0 0.0
  %190 = vmatpush1.msra.mxu0 %v137
  %191 = vmatprep.subr.mxu0 0.0
  %192 = vmatpush1.msra.mxu0 %v138
  %193 = vmatprep.subr.mxu0 0.0
  %194 = vmatpush1.msra.mxu0 %v139
  %195 = vmatprep.subr.mxu0 0.0
  %196 = vmatpush1.msra.mxu0 %v140
  %197 = vmatprep.subr.mxu0 0.0
  %198 = vmatpush1.msra.mxu0 %v141
  %199 = vmatprep.subr.mxu0 0.0
  %200 = vmatpush1.msra.mxu0 %v142
  %201 = vmatprep.subr.mxu0 0.0
  %202 = vmatpush1.msra.mxu0 %v143
  %203 = vmatprep.subr.mxu0 0.0
  %204 = vmatpush1.msra.mxu0 %v144
  %205 = vmatprep.subr.mxu0 0.0
  %206 = vmatpush1.msra.mxu0 %v145
  %207 = vmatprep.subr.mxu0 0.0
  %208 = vmatpush1.msra.mxu0 %v146
  %209 = vmatprep.subr.mxu0 0.0
  %210 = vmatpush1.msra.mxu0 %v147
  %211 = vmatprep.subr.mxu0 0.0
  %212 = vmatpush1.msra.mxu0 %v148
  %213 = vmatprep.mubr.f32.mxu0 %v54
  %214 = vmatmul.mubr.f32.gmra.mrb[0].mxu0 %v53
  %v215 = vpop.f32.mrb[0].mxu0
  %v216 = vadd.f32 0.0, %v215
  %v217 = vpop.f32.mrb[0].mxu0
  %218 = vmatprep.mubr.f32.mxu0 %v56
  %219 = vmatmul.mubr.f32.gmra.mrb[0].mxu0 %v55
  %v220 = vpop.f32.mrb[0].mxu0
  %v221 = vadd.f32 0.0, %v220
  %v222 = vpop.f32.mrb[0].mxu0
  %223 = vmatprep.mubr.f32.mxu0 %v58
  %224 = vmatmul.mubr.f32.gmra.mrb[0].mxu0 %v57
  %v225 = vpop.f32.mrb[0].mxu0
  %v226 = vadd.f32 0.0, %v225
  %v227 = vpop.f32.mrb[0].mxu0
  %228 = vmatprep.mubr.f32.mxu0 %v60
  %229 = vmatmul.mubr.f32.gmra.mrb[0].mxu0 %v59
  %v230 = vpop.f32.mrb[0].mxu0
  %v231 = vadd.f32 0.0, %v230
  %v232 = vpop.f32.mrb[0].mxu0
  %233 = vmatprep.mubr.f32.mxu0 %v62
  %234 = vmatmul.mubr.f32.gmra.mrb[0].mxu0 %v61
  %v235 = vpop.f32.mrb[0].mxu0
  %v236 = vadd.f32 0.0, %v235
  %v237 = vpop.f32.mrb[0].mxu0
  %238 = vmatprep.mubr.f32.mxu0 %v64
  %239 = vmatmul.mubr.f32.gmra.mrb[0].mxu0 %v63
  %v240 = vpop.f32.mrb[0].mxu0
  %v241 = vadd.f32 0.0, %v240
  %v242 = vpop.f32.mrb[0].mxu0
  %243 = vmatprep.mubr.f32.mxu0 %v66
  %244 = vmatmul.mubr.f32.gmra.mrb[0].mxu0 %v65
  %v245 = vpop.f32.mrb[0].mxu0
  %v246 = vadd.f32 0.0, %v245
  %v247 = vpop.f32.mrb[0].mxu0
  %248 = vmatprep.mubr.f32.mxu0 %v68
  %249 = vmatmul.mubr.f32.gmra.mrb[0].mxu0 %v67
  %v250 = vpop.f32.mrb[0].mxu0
  %v251 = vadd.f32 0.0, %v250
  %v252 = vpop.f32.mrb[0].mxu0
  %253 = vmatprep.mubr.f32.mxu0 %v70
  %254 = vmatmul.mubr.f32.gmra.mrb[0].mxu0 %v69
  %v255 = vpop.f32.mrb[0].mxu0
  %v256 = vadd.f32 0.0, %v255
  %v257 = vpop.f32.mrb[0].mxu0
  %258 = vmatprep.mubr.f32.mxu0 %v72
  %259 = vmatmul.mubr.f32.gmra.mrb[0].mxu0 %v71
  %v260 = vpop.f32.mrb[0].mxu0
  %v261 = vadd.f32 0.0, %v260
  %v262 = vpop.f32.mrb[0].mxu0
  %263 = vmatprep.mubr.f32.mxu0 %v74
  %264 = vmatmul.mubr.f32.gmra.mrb[0].mxu0 %v73
  %v265 = vpop.f32.mrb[0].mxu0
  %v266 = vadd.f32 0.0, %v265
  %v267 = vpop.f32.mrb[0].mxu0
  %268 = vmatprep.mubr.f32.mxu0 %v76
  %269 = vmatmul.mubr.f32.gmra.mrb[0].mxu0 %v75
  %v270 = vpop.f32.mrb[0].mxu0
  %v271 = vadd.f32 0.0, %v270
  %v272 = vpop.f32.mrb[0].mxu0
  %273 = vmatprep.mubr.f32.mxu0 %v78
  %274 = vmatmul.mubr.f32.gmra.mrb[0].mxu0 %v77
  %v275 = vpop.f32.mrb[0].mxu0
  %v276 = vadd.f32 0.0, %v275
  %v277 = vpop.f32.mrb[0].mxu0
  %278 = vmatprep.mubr.f32.mxu0 %v80
  %279 = vmatmul.mubr.f32.gmra.mrb[0].mxu0 %v79
  %v280 = vpop.f32.mrb[0].mxu0
  %v281 = vadd.f32 0.0, %v280
  %v282 = vpop.f32.mrb[0].mxu0
  %283 = vmatprep.mubr.f32.mxu0 %v82
  %284 = vmatmul.mubr.f32.gmra.mrb[0].mxu0 %v81
  %v285 = vpop.f32.mrb[0].mxu0
  %v286 = vadd.f32 0.0, %v285
  %v287 = vpop.f32.mrb[0].mxu0
  %288 = vmatprep.mubr.f32.mxu0 %v84
  %289 = vmatmul.mubr.f32.gmra.mrb[0].mxu0 %v83
  %v290 = vpop.f32.mrb[0].mxu0
  %v291 = vadd.f32 0.0, %v290
  %v292 = vpop.f32.mrb[0].mxu0
  %293 = vmatprep.mubr.f32.mxu0 %v86
  %294 = vmatmul.mubr.f32.gmra.mrb[0].mxu0 %v85
  %v295 = vpop.f32.mrb[0].mxu0
  %v296 = vadd.f32 0.0, %v295
  %v297 = vpop.f32.mrb[0].mxu0
  %298 = vmatprep.mubr.f32.mxu0 %v88
  %299 = vmatmul.mubr.f32.gmra.mrb[0].mxu0 %v87
  %v300 = vpop.f32.mrb[0].mxu0
  %v301 = vadd.f32 0.0, %v300
  %v302 = vpop.f32.mrb[0].mxu0
  %303 = vmatprep.mubr.f32.mxu0 %v90
  %304 = vmatmul.mubr.f32.gmra.mrb[0].mxu0 %v89
  %v305 = vpop.f32.mrb[0].mxu0
  %v306 = vadd.f32 0.0, %v305
  %v307 = vpop.f32.mrb[0].mxu0
  %308 = vmatprep.mubr.f32.mxu0 %v92
  %309 = vmatmul.mubr.f32.gmra.mrb[0].mxu0 %v91
  %v310 = vpop.f32.mrb[0].mxu0
  %v311 = vadd.f32 0.0, %v310
  %v312 = vpop.f32.mrb[0].mxu0
  %313 = vmatprep.mubr.f32.mxu0 %v94
  %314 = vmatmul.mubr.f32.gmra.mrb[0].mxu0 %v93
  %v315 = vpop.f32.mrb[0].mxu0
  %v316 = vadd.f32 0.0, %v315
  %v317 = vpop.f32.mrb[0].mxu0
  %318 = vmatprep.mubr.f32.mxu0 %v96
  %319 = vmatmul.mubr.f32.gmra.mrb[0].mxu0 %v95
  %v320 = vpop.f32.mrb[0].mxu0
  %v321 = vadd.f32 0.0, %v320
  %v322 = vpop.f32.mrb[0].mxu0
  %323 = vmatprep.mubr.f32.mxu0 %v98
  %324 = vmatmul.mubr.f32.gmra.mrb[0].mxu0 %v97
  %v325 = vpop.f32.mrb[0].mxu0
  %v326 = vadd.f32 0.0, %v325
  %v327 = vpop.f32.mrb[0].mxu0
  %328 = vmatprep.mubr.f32.mxu0 %v100
  %329 = vmatmul.mubr.f32.gmra.mrb[0].mxu0 %v99
  %v330 = vpop.f32.mrb[0].mxu0
  %v331 = vadd.f32 0.0, %v330
  %v332 = vpop.f32.mrb[0].mxu0
  %333 = vmatprep.mubr.f32.mxu0 %v102
  %334 = vmatmul.mubr.f32.gmra.mrb[0].mxu0 %v101
  %v335 = vpop.f32.mrb[0].mxu0
  %v336 = vadd.f32 0.0, %v335
  %v337 = vpop.f32.mrb[0].mxu0
  %338 = vmatprep.mubr.f32.mxu0 %v104
  %339 = vmatmul.mubr.f32.gmra.mrb[0].mxu0 %v103
  %v340 = vpop.f32.mrb[0].mxu0
  %v341 = vadd.f32 0.0, %v340
  %v342 = vpop.f32.mrb[0].mxu0
  %343 = vmatprep.mubr.f32.mxu0 %v106
  %344 = vmatmul.mubr.f32.gmra.mrb[0].mxu0 %v105
  %v345 = vpop.f32.mrb[0].mxu0
  %v346 = vadd.f32 0.0, %v345
  %v347 = vpop.f32.mrb[0].mxu0
  %348 = vmatprep.mubr.f32.mxu0 %v108
  %349 = vmatmul.mubr.f32.gmra.mrb[0].mxu0 %v107
  %v350 = vpop.f32.mrb[0].mxu0
  %v351 = vadd.f32 0.0, %v350
  %v352 = vpop.f32.mrb[0].mxu0
  %353 = vmatprep.mubr.f32.mxu0 %v110
  %354 = vmatmul.mubr.f32.gmra.mrb[0].mxu0 %v109
  %v355 = vpop.f32.mrb[0].mxu0
  %v356 = vadd.f32 0.0, %v355
  %v357 = vpop.f32.mrb[0].mxu0
  %358 = vmatprep.mubr.f32.mxu0 %v112
  %359 = vmatmul.mubr.f32.gmra.mrb[0].mxu0 %v111
  %v360 = vpop.f32.mrb[0].mxu0
  %v361 = vadd.f32 0.0, %v360
  %v362 = vpop.f32.mrb[0].mxu0
  %363 = vmatprep.mubr.f32.mxu0 %v114
  %364 = vmatmul.mubr.f32.gmra.mrb[0].mxu0 %v113
  %v365 = vpop.f32.mrb[0].mxu0
  %v366 = vadd.f32 0.0, %v365
  %v367 = vpop.f32.mrb[0].mxu0
  %368 = vmatprep.mubr.f32.mxu0 %v116
  %369 = vmatmul.mubr.f32.gmra.mrb[0].mxu0 %v115
  %v370 = vpop.f32.mrb[0].mxu0
  %v371 = vadd.f32 0.0, %v370
  %v372 = vpop.f32.mrb[0].mxu0
  %373 = vdwg.mxu0
  %vm374 = vcmask 261120
  %v376 = vsel %vm374, %v17, 0
  %v379 = vsel %vm374, %v18, 0
  %v382 = vsel %vm374, %v19, 0
  %v385 = vsel %vm374, %v20, 0
  %v388 = vsel %vm374, %v21, 0
  %v391 = vsel %vm374, %v22, 0
  %v394 = vsel %vm374, %v23, 0
  %v397 = vsel %vm374, %v24, 0
  %v400 = vsel %vm374, %v25, 0
  %v403 = vsel %vm374, %v26, 0
  %v406 = vsel %vm374, %v27, 0
  %v409 = vsel %vm374, %v28, 0
  %v412 = vsel %vm374, %v29, 0
  %v415 = vsel %vm374, %v30, 0
  %v418 = vsel %vm374, %v31, 0
  %v421 = vsel %vm374, %v32, 0
  %v424 = vsel %vm374, %v33, 0
  %v427 = vsel %vm374, %v34, 0
  %v430 = vsel %vm374, %v35, 0
  %v433 = vsel %vm374, %v36, 0
  %v436 = vsel %vm374, %v37, 0
  %v439 = vsel %vm374, %v38, 0
  %v442 = vsel %vm374, %v39, 0
  %v445 = vsel %vm374, %v40, 0
  %v448 = vsel %vm374, %v41, 0
  %v451 = vsel %vm374, %v42, 0
  %v454 = vsel %vm374, %v43, 0
  %v457 = vsel %vm374, %v44, 0
  %v460 = vsel %vm374, %v45, 0
  %v463 = vsel %vm374, %v46, 0
  %v466 = vsel %vm374, %v47, 0
  %v469 = vsel %vm374, %v48, 0
  %471 = vmatprep.subr.mxu0 0.0
  %472 = vmatpush1.msra.mxu0 %v49
  %473 = vmatprep.subr.mxu0 0.0
  %474 = vmatpush1.msra.mxu0 %v50
  %475 = vmatprep.subr.mxu0 0.0
  %476 = vmatpush1.msra.mxu0 %v51
  %477 = vmatprep.subr.mxu0 0.0
  %478 = vmatpush1.msra.mxu0 %v52
  %479 = vmatprep.subr.mxu0 0.0
  %480 = vmatpush1.msra.mxu0 0.0
  %481 = vmatprep.subr.mxu0 0.0
  %482 = vmatpush1.msra.mxu0 0.0
  %483 = vmatprep.subr.mxu0 0.0
  %484 = vmatpush1.msra.mxu0 0.0
  %485 = vmatprep.subr.mxu0 0.0
  %486 = vmatpush1.msra.mxu0 0.0
  %487 = vmatprep.subr.mxu0 0.0
  %488 = vmatpush1.msra.mxu0 0.0
  %489 = vmatprep.subr.mxu0 0.0
  %490 = vmatpush1.msra.mxu0 0.0
  %491 = vmatprep.subr.mxu0 0.0
  %492 = vmatpush1.msra.mxu0 0.0
  %493 = vmatprep.subr.mxu0 0.0
  %494 = vmatpush1.msra.mxu0 0.0
  %495 = vmatprep.subr.mxu0 0.0
  %496 = vmatpush1.msra.mxu0 0.0
  %497 = vmatprep.subr.mxu0 0.0
  %498 = vmatpush1.msra.mxu0 0.0
  %499 = vmatprep.subr.mxu0 0.0
  %500 = vmatpush1.msra.mxu0 0.0
  %501 = vmatprep.subr.mxu0 0.0
  %502 = vmatpush1.msra.mxu0 0.0
  %503 = vmatprep.subr.mxu0 0.0
  %504 = vmatpush1.msra.mxu0 0.0
  %505 = vmatprep.subr.mxu0 0.0
  %506 = vmatpush1.msra.mxu0 0.0
  %507 = vmatprep.subr.mxu0 0.0
  %508 = vmatpush1.msra.mxu0 0.0
  %509 = vmatprep.subr.mxu0 0.0
  %510 = vmatpush1.msra.mxu0 0.0
  %511 = vmatprep.subr.mxu0 0.0
  %512 = vmatpush1.msra.mxu0 0.0
  %513 = vmatprep.subr.mxu0 0.0
  %514 = vmatpush1.msra.mxu0 0.0
  %515 = vmatprep.subr.mxu0 0.0
  %516 = vmatpush1.msra.mxu0 0.0
  %517 = vmatprep.subr.mxu0 0.0
  %518 = vmatpush1.msra.mxu0 0.0
  %519 = vmatprep.subr.mxu0 0.0
  %520 = vmatpush1.msra.mxu0 0.0
  %521 = vmatprep.subr.mxu0 0.0
  %522 = vmatpush1.msra.mxu0 0.0
  %523 = vmatprep.subr.mxu0 0.0
  %524 = vmatpush1.msra.mxu0 0.0
  %525 = vmatprep.subr.mxu0 0.0
  %526 = vmatpush1.msra.mxu0 0.0
  %527 = vmatprep.subr.mxu0 0.0
  %528 = vmatpush1.msra.mxu0 0.0
  %529 = vmatprep.subr.mxu0 0.0
  %530 = vmatpush1.msra.mxu0 0.0
  %531 = vmatprep.subr.mxu0 0.0
  %532 = vmatpush1.msra.mxu0 0.0
  %533 = vmatprep.subr.mxu0 0.0
  %534 = vmatpush1.msra.mxu0 0.0
  %535 = vmatprep.mubr.f32.mxu0 0.0
  %536 = vmatmul.mubr.f32.gmra.mrb[0].mxu0 %v376
  %v537 = vpop.f32.mrb[0].mxu0
  %v538 = vadd.f32 %v216, %v537
  %v539 = vpop.f32.mrb[0].mxu0
  %540 = vmatprep.mubr.f32.mxu0 0.0
  %541 = vmatmul.mubr.f32.gmra.mrb[0].mxu0 %v379
  %v542 = vpop.f32.mrb[0].mxu0
  %v543 = vadd.f32 %v221, %v542
  %v544 = vpop.f32.mrb[0].mxu0
  %545 = vmatprep.mubr.f32.mxu0 0.0
  %546 = vmatmul.mubr.f32.gmra.mrb[0].mxu0 %v382
  %v547 = vpop.f32.mrb[0].mxu0
  %v548 = vadd.f32 %v226, %v547
  %v549 = vpop.f32.mrb[0].mxu0
  %550 = vmatprep.mubr.f32.mxu0 0.0
  %551 = vmatmul.mubr.f32.gmra.mrb[0].mxu0 %v385
  %v552 = vpop.f32.mrb[0].mxu0
  %v553 = vadd.f32 %v231, %v552
  %v554 = vpop.f32.mrb[0].mxu0
  %555 = vmatprep.mubr.f32.mxu0 0.0
  %556 = vmatmul.mubr.f32.gmra.mrb[0].mxu0 %v388
  %v557 = vpop.f32.mrb[0].mxu0
  %v558 = vadd.f32 %v236, %v557
  %v559 = vpop.f32.mrb[0].mxu0
  %560 = vmatprep.mubr.f32.mxu0 0.0
  %561 = vmatmul.mubr.f32.gmra.mrb[0].mxu0 %v391
  %v562 = vpop.f32.mrb[0].mxu0
  %v563 = vadd.f32 %v241, %v562
  %v564 = vpop.f32.mrb[0].mxu0
  %565 = vmatprep.mubr.f32.mxu0 0.0
  %566 = vmatmul.mubr.f32.gmra.mrb[0].mxu0 %v394
  %v567 = vpop.f32.mrb[0].mxu0
  %v568 = vadd.f32 %v246, %v567
  %v569 = vpop.f32.mrb[0].mxu0
  %570 = vmatprep.mubr.f32.mxu0 0.0
  %571 = vmatmul.mubr.f32.gmra.mrb[0].mxu0 %v397
  %v572 = vpop.f32.mrb[0].mxu0
  %v573 = vadd.f32 %v251, %v572
  %v574 = vpop.f32.mrb[0].mxu0
  %575 = vmatprep.mubr.f32.mxu0 0.0
  %576 = vmatmul.mubr.f32.gmra.mrb[0].mxu0 %v400
  %v577 = vpop.f32.mrb[0].mxu0
  %v578 = vadd.f32 %v256, %v577
  %v579 = vpop.f32.mrb[0].mxu0
  %580 = vmatprep.mubr.f32.mxu0 0.0
  %581 = vmatmul.mubr.f32.gmra.mrb[0].mxu0 %v403
  %v582 = vpop.f32.mrb[0].mxu0
  %v583 = vadd.f32 %v261, %v582
  %v584 = vpop.f32.mrb[0].mxu0
  %585 = vmatprep.mubr.f32.mxu0 0.0
  %586 = vmatmul.mubr.f32.gmra.mrb[0].mxu0 %v406
  %v587 = vpop.f32.mrb[0].mxu0
  %v588 = vadd.f32 %v266, %v587
  %v589 = vpop.f32.mrb[0].mxu0
  %590 = vmatprep.mubr.f32.mxu0 0.0
  %591 = vmatmul.mubr.f32.gmra.mrb[0].mxu0 %v409
  %v592 = vpop.f32.mrb[0].mxu0
  %v593 = vadd.f32 %v271, %v592
  %v594 = vpop.f32.mrb[0].mxu0
  %595 = vmatprep.mubr.f32.mxu0 0.0
  %596 = vmatmul.mubr.f32.gmra.mrb[0].mxu0 %v412
  %v597 = vpop.f32.mrb[0].mxu0
  %v598 = vadd.f32 %v276, %v597
  %v599 = vpop.f32.mrb[0].mxu0
  %600 = vmatprep.mubr.f32.mxu0 0.0
  %601 = vmatmul.mubr.f32.gmra.mrb[0].mxu0 %v415
  %v602 = vpop.f32.mrb[0].mxu0
  %v603 = vadd.f32 %v281, %v602
  %v604 = vpop.f32.mrb[0].mxu0
  %605 = vmatprep.mubr.f32.mxu0 0.0
  %606 = vmatmul.mubr.f32.gmra.mrb[0].mxu0 %v418
  %v607 = vpop.f32.mrb[0].mxu0
  %v608 = vadd.f32 %v286, %v607
  %v609 = vpop.f32.mrb[0].mxu0
  %610 = vmatprep.mubr.f32.mxu0 0.0
  %611 = vmatmul.mubr.f32.gmra.mrb[0].mxu0 %v421
  %v612 = vpop.f32.mrb[0].mxu0
  %v613 = vadd.f32 %v291, %v612
  %v614 = vpop.f32.mrb[0].mxu0
  %615 = vmatprep.mubr.f32.mxu0 0.0
  %616 = vmatmul.mubr.f32.gmra.mrb[0].mxu0 %v424
  %v617 = vpop.f32.mrb[0].mxu0
  %v618 = vadd.f32 %v296, %v617
  %v619 = vpop.f32.mrb[0].mxu0
  %620 = vmatprep.mubr.f32.mxu0 0.0
  %621 = vmatmul.mubr.f32.gmra.mrb[0].mxu0 %v427
  %v622 = vpop.f32.mrb[0].mxu0
  %v623 = vadd.f32 %v301, %v622
  %v624 = vpop.f32.mrb[0].mxu0
  %625 = vmatprep.mubr.f32.mxu0 0.0
  %626 = vmatmul.mubr.f32.gmra.mrb[0].mxu0 %v430
  %v627 = vpop.f32.mrb[0].mxu0
  %v628 = vadd.f32 %v306, %v627
  %v629 = vpop.f32.mrb[0].mxu0
  %630 = vmatprep.mubr.f32.mxu0 0.0
  %631 = vmatmul.mubr.f32.gmra.mrb[0].mxu0 %v433
  %v632 = vpop.f32.mrb[0].mxu0
  %v633 = vadd.f32 %v311, %v632
  %v634 = vpop.f32.mrb[0].mxu0
  %635 = vmatprep.mubr.f32.mxu0 0.0
  %636 = vmatmul.mubr.f32.gmra.mrb[0].mxu0 %v436
  %v637 = vpop.f32.mrb[0].mxu0
  %v638 = vadd.f32 %v316, %v637
  %v639 = vpop.f32.mrb[0].mxu0
  %640 = vmatprep.mubr.f32.mxu0 0.0
  %641 = vmatmul.mubr.f32.gmra.mrb[0].mxu0 %v439
  %v642 = vpop.f32.mrb[0].mxu0
  %v643 = vadd.f32 %v321, %v642
  %v644 = vpop.f32.mrb[0].mxu0
  %645 = vmatprep.mubr.f32.mxu0 0.0
  %646 = vmatmul.mubr.f32.gmra.mrb[0].mxu0 %v442
  %v647 = vpop.f32.mrb[0].mxu0
  %v648 = vadd.f32 %v326, %v647
  %v649 = vpop.f32.mrb[0].mxu0
  %650 = vmatprep.mubr.f32.mxu0 0.0
  %651 = vmatmul.mubr.f32.gmra.mrb[0].mxu0 %v445
  %v652 = vpop.f32.mrb[0].mxu0
  %v653 = vadd.f32 %v331, %v652
  %v654 = vpop.f32.mrb[0].mxu0
  %655 = vmatprep.mubr.f32.mxu0 0.0
  %656 = vmatmul.mubr.f32.gmra.mrb[0].mxu0 %v448
  %v657 = vpop.f32.mrb[0].mxu0
  %v658 = vadd.f32 %v336, %v657
  %v659 = vpop.f32.mrb[0].mxu0
  %660 = vmatprep.mubr.f32.mxu0 0.0
  %661 = vmatmul.mubr.f32.gmra.mrb[0].mxu0 %v451
  %v662 = vpop.f32.mrb[0].mxu0
  %v663 = vadd.f32 %v341, %v662
  %v664 = vpop.f32.mrb[0].mxu0
  %665 = vmatprep.mubr.f32.mxu0 0.0
  %666 = vmatmul.mubr.f32.gmra.mrb[0].mxu0 %v454
  %v667 = vpop.f32.mrb[0].mxu0
  %v668 = vadd.f32 %v346, %v667
  %v669 = vpop.f32.mrb[0].mxu0
  %670 = vmatprep.mubr.f32.mxu0 0.0
  %671 = vmatmul.mubr.f32.gmra.mrb[0].mxu0 %v457
  %v672 = vpop.f32.mrb[0].mxu0
  %v673 = vadd.f32 %v351, %v672
  %v674 = vpop.f32.mrb[0].mxu0
  %675 = vmatprep.mubr.f32.mxu0 0.0
  %676 = vmatmul.mubr.f32.gmra.mrb[0].mxu0 %v460
  %v677 = vpop.f32.mrb[0].mxu0
  %v678 = vadd.f32 %v356, %v677
  %v679 = vpop.f32.mrb[0].mxu0
  %680 = vmatprep.mubr.f32.mxu0 0.0
  %681 = vmatmul.mubr.f32.gmra.mrb[0].mxu0 %v463
  %v682 = vpop.f32.mrb[0].mxu0
  %v683 = vadd.f32 %v361, %v682
  %v684 = vpop.f32.mrb[0].mxu0
  %685 = vmatprep.mubr.f32.mxu0 0.0
  %686 = vmatmul.mubr.f32.gmra.mrb[0].mxu0 %v466
  %v687 = vpop.f32.mrb[0].mxu0
  %v688 = vadd.f32 %v366, %v687
  %v689 = vpop.f32.mrb[0].mxu0
  %690 = vmatprep.mubr.f32.mxu0 0.0
  %691 = vmatmul.mubr.f32.gmra.mrb[0].mxu0 %v469
  %v692 = vpop.f32.mrb[0].mxu0
  %v693 = vadd.f32 %v371, %v692
  %v694 = vpop.f32.mrb[0].mxu0
  %695 = vdwg.mxu0
  %v696 = vmax.f32 %v538, 0.0
  %v697 = vmax.f32 %v543, 0.0
  %v698 = vmax.f32 %v548, 0.0
  %v699 = vmax.f32 %v553, 0.0
  %v700 = vmax.f32 %v558, 0.0
  %v701 = vmax.f32 %v563, 0.0
  %v702 = vmax.f32 %v568, 0.0
  %v703 = vmax.f32 %v573, 0.0
  %v704 = vmax.f32 %v578, 0.0
  %v705 = vmax.f32 %v583, 0.0
  %v706 = vmax.f32 %v588, 0.0
  %v707 = vmax.f32 %v593, 0.0
  %v708 = vmax.f32 %v598, 0.0
  %v709 = vmax.f32 %v603, 0.0
  %v710 = vmax.f32 %v608, 0.0
  %v711 = vmax.f32 %v613, 0.0
  %v712 = vmax.f32 %v618, 0.0
  %v713 = vmax.f32 %v623, 0.0
  %v714 = vmax.f32 %v628, 0.0
  %v715 = vmax.f32 %v633, 0.0
  %v716 = vmax.f32 %v638, 0.0
  %v717 = vmax.f32 %v643, 0.0
  %v718 = vmax.f32 %v648, 0.0
  %v719 = vmax.f32 %v653, 0.0
  %v720 = vmax.f32 %v658, 0.0
  %v721 = vmax.f32 %v663, 0.0
  %v722 = vmax.f32 %v668, 0.0
  %v723 = vmax.f32 %v673, 0.0
  %v724 = vmax.f32 %v678, 0.0
  %v725 = vmax.f32 %v683, 0.0
  %v726 = vmax.f32 %v688, 0.0
  %v727 = vmax.f32 %v693, 0.0
  %728 = vst.msk [vmem:[%s4] sm:$0xff] %vm374, %v696
  %729 = vst.msk [vmem:[%s4 + $0x8] sm:$0xff] %vm374, %v697
  %730 = vst.msk [vmem:[%s4 + $0x10] sm:$0xff] %vm374, %v698
  %731 = vst.msk [vmem:[%s4 + $0x18] sm:$0xff] %vm374, %v699
  %732 = vst.msk [vmem:[%s4 + $0x20] sm:$0xff] %vm374, %v700
  %733 = vst.msk [vmem:[%s4 + $0x28] sm:$0xff] %vm374, %v701
  %734 = vst.msk [vmem:[%s4 + $0x30] sm:$0xff] %vm374, %v702
  %735 = vst.msk [vmem:[%s4 + $0x38] sm:$0xff] %vm374, %v703
  %736 = vst.msk [vmem:[%s4 + $0x40] sm:$0xff] %vm374, %v704
  %737 = vst.msk [vmem:[%s4 + $0x48] sm:$0xff] %vm374, %v705
  %738 = vst.msk [vmem:[%s4 + $0x50] sm:$0xff] %vm374, %v706
  %739 = vst.msk [vmem:[%s4 + $0x58] sm:$0xff] %vm374, %v707
  %740 = vst.msk [vmem:[%s4 + $0x60] sm:$0xff] %vm374, %v708
  %741 = vst.msk [vmem:[%s4 + $0x68] sm:$0xff] %vm374, %v709
  %742 = vst.msk [vmem:[%s4 + $0x70] sm:$0xff] %vm374, %v710
  %743 = vst.msk [vmem:[%s4 + $0x78] sm:$0xff] %vm374, %v711
  %744 = vst.msk [vmem:[%s4 + $0x80] sm:$0xff] %vm374, %v712
  %745 = vst.msk [vmem:[%s4 + $0x88] sm:$0xff] %vm374, %v713
  %746 = vst.msk [vmem:[%s4 + $0x90] sm:$0xff] %vm374, %v714
  %747 = vst.msk [vmem:[%s4 + $0x98] sm:$0xff] %vm374, %v715
  %748 = vst.msk [vmem:[%s4 + $0xa0] sm:$0xff] %vm374, %v716
  %749 = vst.msk [vmem:[%s4 + $0xa8] sm:$0xff] %vm374, %v717
  %750 = vst.msk [vmem:[%s4 + $0xb0] sm:$0xff] %vm374, %v718
  %751 = vst.msk [vmem:[%s4 + $0xb8] sm:$0xff] %vm374, %v719
  %752 = vst.msk [vmem:[%s4 + $0xc0] sm:$0xff] %vm374, %v720
  %753 = vst.msk [vmem:[%s4 + $0xc8] sm:$0xff] %vm374, %v721
  %754 = vst.msk [vmem:[%s4 + $0xd0] sm:$0xff] %vm374, %v722
  %755 = vst.msk [vmem:[%s4 + $0xd8] sm:$0xff] %vm374, %v723
  %756 = vst.msk [vmem:[%s4 + $0xe0] sm:$0xff] %vm374, %v724
  %757 = vst.msk [vmem:[%s4 + $0xe8] sm:$0xff] %vm374, %v725
  %758 = vst.msk [vmem:[%s4 + $0xf0] sm:$0xff] %vm374, %v726
  %759 = vst.msk [vmem:[%s4 + $0xf8] sm:$0xff] %vm374, %v727
  // Predicated region
  $region18: #{tpu_custom_call.1} parent=0 // pred_check
    _
  $region19: #{tpu_custom_call.1} parent=0 // pred_check_branch
    %761 = sbr.rel (0) target = $region21
  $region20: #{tpu_custom_call.1} parent=0 // pred_region
    _
  $region21: #{tpu_custom_call.1} parent=0 // pred_fallthru
    _
  // Predicated region
  $region22: #{tpu_custom_call.1} parent=0 // pred_check
    _
  $region23: #{tpu_custom_call.1} parent=0 // pred_check_branch
    %763 = sbr.rel (0) target = $region25
  $region24: #{tpu_custom_call.1} parent=0 // pred_region
    _
  $region25: #{tpu_custom_call.1} parent=0 // pred_fallthru
    _

</llo_original>
